<compile_context>
chip_gen: v5e
topology: v5e:2x2
jax: 0.10.0
libtpu: 0.0.40
codegen_flags: <defaults>
</compile_context>

<pallas_src>
import functools
import math

import jax
import jax.numpy as jnp
from jax.experimental import pallas as pl
from jax.experimental.pallas import tpu as pltpu

OUT_PAD = 128                             # lane-dense class dim (real = 10)
MAX_TM = 1024                             # max batch-tile rows   (mult of 8)
MAX_TK = 2048                             # max feature-tile cols (mult of 128)
W_RESIDENT_MAX_BYTES = 8 * 1024 * 1024    # keep whole W in VMEM up to this


def _round_up(x, m):
    return ((x + m - 1) // m) * m


def plan_tiles(n, d):
    """Pick (tm, tk, d_pad, k_tiles, w_resident) for an (n, d) problem."""
    tm = min(MAX_TM, _round_up(max(n, 1), 8))
    if d <= MAX_TK:
        tk, d_pad = d, d                  # full-dim feature block: no K padding
    else:
        tk = MAX_TK
        d_pad = _round_up(d, tk)          # only the WEIGHT is padded, never X
    k_tiles = d_pad // tk
    w_resident = d_pad * OUT_PAD * 4 <= W_RESIDENT_MAX_BYTES
    return tm, tk, d_pad, k_tiles, w_resident


def prepare_params(weight, bias, d_pad, dtype=jnp.float32):
    """One-time layout prep: (10, D) torch weight -> zero-padded (d_pad, 128)."""
    n_classes, d = weight.shape
    w = jnp.zeros((d_pad, OUT_PAD), dtype).at[:d, :n_classes].set(
        weight.T.astype(dtype))
    b = jnp.zeros((1, OUT_PAD), dtype).at[:, :n_classes].set(
        bias.astype(dtype)[None, :])
    return w, b


def _vmem_limit_bytes():
    """Generation-aware scoped-VMEM cap (None -> compiler default)."""
    try:
        kind = jax.devices()[0].device_kind.lower()
    except Exception:
        kind = ""
    if "v5" in kind or "v6" in kind:
        return 64 * 1024 * 1024           # 128 MiB physical: deep buffers OK
    if "v7" in kind or "7x" in kind:
        return 40 * 1024 * 1024           # 64 MiB physical: stay clear of OOM
    return None


# -----------------------------------------------------------------------------
# Kernels
# -----------------------------------------------------------------------------
def _logreg_kernel_single(x_ref, w_ref, b_ref, o_ref):
    # Whole feature dim in one tile: no init/accumulate/finalize phases.
    o_ref[...] = (jnp.dot(x_ref[...], w_ref[...],
                          preferred_element_type=jnp.float32)
                  + b_ref[...]).astype(o_ref.dtype)


def _logreg_kernel_multi(x_ref, w_ref, b_ref, o_ref, *, d, tk, w_resident):
    # Output tile is the accumulator (resident across K: its index_map
    # ignores k). Zero @ k==0, accumulate, add bias @ k==last.
    k = pl.program_id(1)

    @pl.when(k == 0)
    def _():
        o_ref[...] = jnp.zeros_like(o_ref)

    xv = x_ref[...]
    if d % tk != 0:
        # Static guard: only the ragged last K tile can contain unspecified
        # out-of-bounds X data; mask it so NaN/Inf garbage cannot leak in.
        col = jax.lax.broadcasted_iota(jnp.int32, xv.shape, 1)
        xv = jnp.where(col < d - k * tk, xv, 0.0)

    if w_resident:
        # Whole (d_pad, 128) weight panel lives in VMEM (DMAed once); slice it.
        off = pl.multiple_of(k * tk, tk)
        w_blk = w_ref[pl.ds(off, tk), :]
    else:
        w_blk = w_ref[...]

    o_ref[...] += jnp.dot(xv, w_blk, preferred_element_type=jnp.float32)

    @pl.when(k == pl.num_programs(1) - 1)
    def _():
        o_ref[...] += b_ref[...]


# -----------------------------------------------------------------------------
# Wrapper
# -----------------------------------------------------------------------------
@functools.partial(
    jax.jit,
    static_argnames=("n_classes", "d", "tm", "tk", "d_pad", "k_tiles",
                     "w_resident"))
def logreg_forward(x_nchw, w_pad, b_pad, *, n_classes, d, tm, tk, d_pad,
                   k_tiles, w_resident):
    """x_nchw: (N, C, H, W); w_pad: (d_pad, 128); b_pad: (1, 128)."""
    n = x_nchw.shape[0]
    # Flatten (row-major == torch.nn.Flatten). No padded copies of X in HBM.
    x = x_nchw.reshape(n, d).astype(w_pad.dtype)

    m_tiles = pl.cdiv(n, tm)
    vmem_limit = _vmem_limit_bytes()

    # TODO(synk): for batch-starved shapes on v7x (m_tiles == 1) split K across
    # the two TensorCores with per-core partial sums; single-core here.
    if k_tiles == 1:
        out = pl.pallas_call(
            _logreg_kernel_single,
            out_shape=jax.ShapeDtypeStruct((n, OUT_PAD), jnp.float32),
            grid=(m_tiles,),
            in_specs=[
                pl.BlockSpec((tm, d), lambda i: (i, 0)),          # X batch tile
                pl.BlockSpec((d, OUT_PAD), lambda i: (0, 0)),     # W (resident)
                pl.BlockSpec((1, OUT_PAD), lambda i: (0, 0)),     # bias
            ],
            out_specs=pl.BlockSpec((tm, OUT_PAD), lambda i: (i, 0)),
            compiler_params=pltpu.CompilerParams(
                dimension_semantics=("parallel",),
                vmem_limit_bytes=vmem_limit),
        )(x, w_pad, b_pad)
    else:
        if w_resident:
            w_spec = pl.BlockSpec((d_pad, OUT_PAD), lambda i, k: (0, 0))
        else:
            w_spec = pl.BlockSpec((tk, OUT_PAD), lambda i, k: (k, 0))
        kernel = functools.partial(_logreg_kernel_multi, d=d, tk=tk,
                                   w_resident=w_resident)
        out = pl.pallas_call(
            kernel,
            out_shape=jax.ShapeDtypeStruct((n, OUT_PAD), jnp.float32),
            grid=(m_tiles, k_tiles),
            in_specs=[
                pl.BlockSpec((tm, tk), lambda i, k: (i, k)),      # X tiles
                w_spec,                                           # weights
                pl.BlockSpec((1, OUT_PAD), lambda i, k: (0, 0)),  # bias
            ],
            out_specs=pl.BlockSpec((tm, OUT_PAD), lambda i, k: (i, 0)),
            compiler_params=pltpu.CompilerParams(
                dimension_semantics=("parallel", "arbitrary"),
                vmem_limit_bytes=vmem_limit),
        )(x, w_pad, b_pad)

    # Drop the zero-filled class-padding columns (batch is never padded).
    return out[:, :n_classes]


def logreg_apply(x_nchw, weight, bias, *, min_pallas_elems=1 << 18):
    """End-to-end forward. Tiny problems go straight to XLA (fusion beats the
    pallas_call fixed overhead); everything else runs the Pallas kernel."""
    n = x_nchw.shape[0]
    d = math.prod(x_nchw.shape[1:])
    if n * d < min_pallas_elems:
        return x_nchw.reshape(n, d) @ weight.T + bias
    tm, tk, d_pad, k_tiles, w_resident = plan_tiles(n, d)
    w_pad, b_pad = prepare_params(weight, bias, d_pad)
    return logreg_forward(x_nchw, w_pad, b_pad, n_classes=weight.shape[0],
                          d=d, tm=tm, tk=tk, d_pad=d_pad, k_tiles=k_tiles,
                          w_resident=w_resident)


if __name__ == "__main__":
    # --- Case 1: shapes implied by the module (sklearn-digits logreg) --------
    N, C, H, W = 2, 1, 8, 8
    D, OUT = C * H * W, 10

    key = jax.random.PRNGKey(0)
    kx, kw, kb = jax.random.split(key, 3)

    x = jax.random.normal(kx, (N, C, H, W), dtype=jnp.float32)
    bound = 1.0 / (D ** 0.5)
    weight = jax.random.uniform(kw, (OUT, D), minval=-bound, maxval=bound,
                                dtype=jnp.float32)
    bias = jax.random.uniform(kb, (OUT,), minval=-bound, maxval=bound,
                              dtype=jnp.float32)

    tm, tk, d_pad, k_tiles, w_res = plan_tiles(N, D)
    w_pad, b_pad = prepare_params(weight, bias, d_pad)
    out = logreg_forward(x, w_pad, b_pad, n_classes=OUT, d=D, tm=tm, tk=tk,
                         d_pad=d_pad, k_tiles=k_tiles, w_resident=w_res)
    out = jax.block_until_ready(out)

    ref = x.reshape(N, D) @ weight.T + bias
    assert out.shape == (N, OUT)
    assert jnp.allclose(out, ref, atol=1e-5, rtol=1e-5)

    # Dispatcher (tiny-problem fast path) must agree too.
    out_fast = jax.block_until_ready(logreg_apply(x, weight, bias))
    assert jnp.allclose(out_fast, ref, atol=1e-5, rtol=1e-5)

    # --- Case 2: exercise the multi-K accumulate path (resident W + masking) -
    N2, C2, H2, W2 = 4, 3, 32, 32                 # D2 = 3072 > MAX_TK
    D2 = C2 * H2 * W2
    x2 = jax.random.normal(kx, (N2, C2, H2, W2), dtype=jnp.float32)
    bound2 = 1.0 / (D2 ** 0.5)
    weight2 = jax.random.uniform(kw, (OUT, D2), minval=-bound2, maxval=bound2,
                                 dtype=jnp.float32)
    bias2 = jax.random.uniform(kb, (OUT,), minval=-bound2, maxval=bound2,
                               dtype=jnp.float32)

    tm2, tk2, d_pad2, k_tiles2, w_res2 = plan_tiles(N2, D2)
    w2_pad, b2_pad = prepare_params(weight2, bias2, d_pad2)
    out2 = logreg_forward(x2, w2_pad, b2_pad, n_classes=OUT, d=D2, tm=tm2,
                          tk=tk2, d_pad=d_pad2, k_tiles=k_tiles2,
                          w_resident=w_res2)
    out2 = jax.block_until_ready(out2)

    ref2 = jnp.dot(x2.reshape(N2, D2), weight2.T,
                   precision=jax.lax.Precision.HIGHEST) + bias2
    assert out2.shape == (N2, OUT)
    assert jnp.allclose(out2, ref2, atol=1e-3, rtol=1e-3)

    print("KERNEL_OK")
</pallas_src>

<mosaic_0001>
module attributes {stable_mosaic.version = 11 : i64} {
  func.func @_logreg_kernel_single(%arg0: i32, %arg1: memref<8x64xf32, #tpu.memory_space<vmem>>, %arg2: memref<64x128xf32, #tpu.memory_space<vmem>>, %arg3: memref<1x128xf32, #tpu.memory_space<vmem>>, %arg4: memref<8x128xf32, #tpu.memory_space<vmem>>) attributes {dimension_semantics = [#tpu.dimension_semantics<parallel>], iteration_bounds = array<i64: 1>, scalar_prefetch = 0 : i64, scratch_operands = 0 : i64, tpu.core_type = #tpu.core_type<tc>, window_params = [{transform_indices = @transform_0, window_bounds = array<i64: 8, 64>}, {pipeline_mode = #tpu.pipeline_mode<synchronous>, transform_indices = @transform_1, window_bounds = array<i64: 64, 128>}, {pipeline_mode = #tpu.pipeline_mode<synchronous>, transform_indices = @transform_2, window_bounds = array<i64: 1, 128>}, {transform_indices = @transform_3, window_bounds = array<i64: 8, 128>}]} {
    %c0 = arith.constant 0 : index
    %c0_0 = arith.constant 0 : index
    %0 = vector.load %arg1[%c0, %c0_0] : memref<8x64xf32, #tpu.memory_space<vmem>>, vector<8x64xf32>
    %c0_1 = arith.constant 0 : index
    %c0_2 = arith.constant 0 : index
    %1 = vector.load %arg2[%c0_1, %c0_2] : memref<64x128xf32, #tpu.memory_space<vmem>>, vector<64x128xf32>
    %cst = arith.constant dense<0.000000e+00> : vector<8x128xf32>
    %2 = tpu.matmul %0, %1, %cst {dimension_numbers = #tpu.dot_dimension_numbers<[1], [0], [0], [1], [0, 0, 1, 1], [], []>} : vector<8x64xf32>, vector<64x128xf32>, vector<8x128xf32> -> vector<8x128xf32>
    %c0_3 = arith.constant 0 : index
    %c0_4 = arith.constant 0 : index
    %3 = vector.load %arg3[%c0_3, %c0_4] : memref<1x128xf32, #tpu.memory_space<vmem>>, vector<1x128xf32>
    %4 = vector.broadcast %3 : vector<1x128xf32> to vector<8x128xf32>
    %5 = arith.addf %2, %4 : vector<8x128xf32>
    %c0_5 = arith.constant 0 : index
    %c0_6 = arith.constant 0 : index
    %6 = vector.load %arg4[%c0_5, %c0_6] : memref<8x128xf32, #tpu.memory_space<vmem>>, vector<8x128xf32>
    tpu.vector_store %arg4[%c0_5, %c0_6], %5 {strides = array<i32>} : memref<8x128xf32, #tpu.memory_space<vmem>>, vector<8x128xf32>,
    return
  }
  func.func @transform_0(%arg0: i32) -> (i32, i32) {
    %c0_i32 = arith.constant 0 : i32
    %c0_i32_0 = arith.constant 0 : i32
    return %arg0, %c0_i32 : i32, i32
  }
  func.func @transform_1(%arg0: i32) -> (i32, i32) {
    %c0_i32 = arith.constant 0 : i32
    %c0_i32_0 = arith.constant 0 : i32
    %c0_i32_1 = arith.constant 0 : i32
    return %c0_i32, %c0_i32_0 : i32, i32
  }
  func.func @transform_2(%arg0: i32) -> (i32, i32) {
    %c0_i32 = arith.constant 0 : i32
    %c0_i32_0 = arith.constant 0 : i32
    %c0_i32_1 = arith.constant 0 : i32
    return %c0_i32, %c0_i32_0 : i32, i32
  }
  func.func @transform_3(%arg0: i32) -> (i32, i32) {
    %c0_i32 = arith.constant 0 : i32
    %c0_i32_0 = arith.constant 0 : i32
    return %arg0, %c0_i32 : i32, i32
  }
}

</mosaic_0001>

<llo_original>
// kernel: logreg_forward.1
$region0: #{logreg_forward.1}
  #allocation0 [shape = 'u32[]', space=smem, size = 0x4, offset = 0x4, fixed_abs, tag = 'smem constant byte address 0x4 - core index']
  #allocation1 [shape = 'u32[72,128]{1,0:T(1,128)}', space=vmem, size = 0x9000, scoped, tag = 'internal scratch']
  %s0 = inlined_call_operand.vmem [shape: f32[2,64], index: 0, kind: input, shape index: {}]
  %s1 = inlined_call_operand.hbm [shape: f32[64,128], index: 1, kind: input, shape index: {}]
  %s2 = inlined_call_operand.vmem [shape: f32[1,128], index: 2, kind: input, shape index: {}]
  %s3 = inlined_call_operand.hbm [shape: f32[2,128], index: 3, kind: output, shape index: {}]
  %s4 = sld [smem:[#allocation0]]
  $region26: #{logreg_forward.1} parent=0
    _
  %s6 = ssub.s32 1, %s4
  %s7 = scalar_select 0, %s6, %s4
  $region1: #{logreg_forward.1} parent=0
    #allocation2 [shape = 'u8[32768]{0}', space=vmem, size = 0x8000, scoped, tag = 'input window, operand 1, single buffered']
    #allocation3 [shape = 's32[1]{0}', space=sflag, size = 0x4, scoped, tag = 'scoped memory for logreg_forward.1']
    #allocation4 [shape = 's32[1]{0}', space=sflag, size = 0x4, scoped, tag = 'scoped memory for logreg_forward.1']
    #allocation5 [shape = 'u8[4096]{0}', space=vmem, size = 0x1000, scoped, tag = 'output window, operand 0, single buffered']
    %8 = vsyncpa [#allocation3], 0
    %9 = vsyncpa [#allocation4], 0
    // Predicated region
    $region2: #{logreg_forward.1} parent=1 // pred_check
      _
    $region3: #{logreg_forward.1} parent=1 // pred_check_branch
      %11 = sbr.rel (0) target = $region5
    $region4: #{logreg_forward.1} parent=1 // pred_region
      _
    $region5: #{logreg_forward.1} parent=1 // pred_fallthru
      _
    // Predicated region
    $region6: #{logreg_forward.1} parent=1 // pred_check
      _
    $region7: #{logreg_forward.1} parent=1 // pred_check_branch
      %13 = sbr.rel (0) target = $region9
    $region8: #{logreg_forward.1} parent=1 // pred_region
      %15 = vsyncadd [#allocation3], 0
      %s16 = sshll.u32 %s1, 4
      %s17 = int_to_ptr.hbm [resolvable:$true] %s16
      %s18 = sshll.u32 [#allocation2], 4
      %s19 = int_to_ptr.vmem [resolvable:$true] %s18
      %24 = dma.hbm_to_vmem [thread:$0]  %s17, 1024, %s19, [#allocation3], 128, 128, 8
    $region9: #{logreg_forward.1} parent=1 // pred_fallthru
      _
    // Predicated region
    $region10: #{logreg_forward.1} parent=1 // pred_check
      _
    $region11: #{logreg_forward.1} parent=1 // pred_check_branch
      %26 = sbr.rel (0) target = $region13
    $region12: #{logreg_forward.1} parent=1 // pred_region
      _
    $region13: #{logreg_forward.1} parent=1 // pred_fallthru
      _
    // Predicated region
    $region14: #{logreg_forward.1} parent=1 // pred_check
      _
    $region15: #{logreg_forward.1} parent=1 // pred_check_branch
      %28 = sbr.rel (0) target = $region17
    $region16: #{logreg_forward.1} parent=1 // pred_region
      %30 = dma.done [#allocation3], 1024
    $region17: #{logreg_forward.1} parent=1 // pred_fallthru
      _
    %v31 = vld [vmem:[%s0] sm:$0xff]
    %v32 = vld [vmem:[#allocation2] sm:$0xff]
    %v33 = vld [vmem:[#allocation2 + $0x8] sm:$0xff]
    %v34 = vld [vmem:[#allocation2 + $0x10] sm:$0xff]
    %v35 = vld [vmem:[#allocation2 + $0x18] sm:$0xff]
    %v36 = vld [vmem:[#allocation2 + $0x20] sm:$0xff]
    %v37 = vld [vmem:[#allocation2 + $0x28] sm:$0xff]
    %v38 = vld [vmem:[#allocation2 + $0x30] sm:$0xff]
    %v39 = vld [vmem:[#allocation2 + $0x38] sm:$0xff]
    %v40 = vld [vmem:[%s2] sm:$0x1]
    %v42 = vperm.slane %v40, 0
    %vm44 = vcmask 523264
    %v46 = vsel %vm44, %v31, 0
    %48 = vmatpush.msra.mxu0 0.0
    %49 = vmatpush.msra.mxu0 0.0
    %50 = vmatpush.msra.mxu0 0.0
    %51 = vmatpush.msra.mxu0 0.0
    %52 = vmatpush.msra.mxu0 0.0
    %53 = vmatpush.msra.mxu0 0.0
    %54 = vmatpush.msra.mxu0 0.0
    %55 = vmatpush.msra.mxu0 0.0
    %56 = vmatpush.msra.mxu0 %v39
    %57 = vmatpush.msra.mxu0 %v38
    %58 = vmatpush.msra.mxu0 %v37
    %59 = vmatpush.msra.mxu0 %v36
    %60 = vmatpush.msra.mxu0 %v35
    %61 = vmatpush.msra.mxu0 %v34
    %62 = vmatpush.msra.mxu0 %v33
    %63 = vmatpush.msra.mxu0 %v32
    %64 = vmatmul.f32.gmra.mxu0 %v46
    %v65 = vpop.f32.mrf.mxu0
    %v66 = vadd.f32 %v42, %v65
    %67 = vdwg.mxu0
    %68 = vst [vmem:[#allocation5] sm:$0xff] %v66
    // Predicated region
    $region18: #{logreg_forward.1} parent=1 // pred_check
      _
    $region19: #{logreg_forward.1} parent=1 // pred_check_branch
      %70 = sbr.rel (0) target = $region21
    $region20: #{logreg_forward.1} parent=1 // pred_region
      %72 = vsyncadd [#allocation4], 96
      %s73 = sshll.u32 [#allocation5], 4
      %s74 = int_to_ptr.vmem [resolvable:$true] %s73
      %s75 = sshll.u32 %s3, 4
      %s76 = int_to_ptr.hbm [resolvable:$true] %s75
      %81 = dma.vmem_to_hbm [thread:$0]  %s74, 32, %s76, [#allocation4], 32, 32, 2
    $region21: #{logreg_forward.1} parent=1 // pred_fallthru
      _
    // Predicated region
    $region22: #{logreg_forward.1} parent=1 // pred_check
      _
    $region23: #{logreg_forward.1} parent=1 // pred_check_branch
      %83 = sbr.rel (0) target = $region25
    $region24: #{logreg_forward.1} parent=1 // pred_region
      %85 = dma.done [#allocation4], 128
    $region25: #{logreg_forward.1} parent=1 // pred_fallthru
      _
    %86 = vsyncpa [#allocation3], 1
    %87 = vsyncpa [#allocation4], 1

</llo_original>
